<compile_context>
chip_gen: v7x
topology: tpu7x:2x2x1
jax: 0.10.0
libtpu: 0.0.40
codegen_flags: <defaults>
</compile_context>

<pallas_src>
import jax
import jax.numpy as jnp
from jax.experimental import pallas as pl
from jax.experimental.pallas import tpu as pltpu


_LN_EPS = 1e-5


def _round_up(x, m):
    return ((x + m - 1) // m) * m


def _batch_tiling(B, tile_b):
    """Return (tb, b_pad, n_steps). tb is a multiple of 8; when more than one
    grid step is needed the step count is rounded up to an even number so the
    two v7x TensorCores both get work on the 'parallel' batch axis."""
    b8 = _round_up(max(B, 1), 8)
    if b8 <= tile_b:
        return b8, b8, 1
    n = -(-b8 // tile_b)          # cdiv
    if n % 2:
        n += 1                    # even step count for megacore sharding
    tb = _round_up(-(-b8 // n), 8)
    return tb, n * tb, n


def ffn_kernel(x_ref,
               w1_ref, b1_ref, g1_ref, beta1_ref,
               w2_ref, b2_ref, g2_ref, beta2_ref,
               w3_ref, b3_ref,
               o_ref):
    """One batch tile: Linear->LN->ReLU->Linear->LN->ReLU->Linear->10*sigmoid."""
    # Hoist the small (1, feat) params: read each ref exactly once per grid step
    # (JAX does not CSE broadcast_in_dim).
    b1, g1, beta1 = b1_ref[...], g1_ref[...], beta1_ref[...]
    b2, g2, beta2 = b2_ref[...], g2_ref[...], beta2_ref[...]
    b3 = b3_ref[...]

    mm_dtype = w1_ref.dtype          # matmul operand dtype (bf16 on the fast path)
    out_dim = o_ref.shape[-1]        # true (unpadded) output width

    def layernorm(h, gamma, beta):
        # One-pass stats (reductions ride XLU, rsqrt rides EUP); variance is
        # clamped to >= 0 to guard against f32 cancellation producing NaNs.
        inv_n = 1.0 / h.shape[-1]
        mu = jnp.sum(h, axis=-1, keepdims=True) * inv_n
        ms = jnp.sum(h * h, axis=-1, keepdims=True) * inv_n
        var = jnp.maximum(ms - mu * mu, 0.0)
        return (h - mu) * jax.lax.rsqrt(var + _LN_EPS) * gamma + beta

    x = x_ref[...]

    # layer1 + norm1 + relu  (MXU in mm_dtype, f32 accumulation, f32 elementwise)
    h = jnp.dot(x.astype(mm_dtype), w1_ref[...],
                preferred_element_type=jnp.float32) + b1
    h = jnp.maximum(layernorm(h, g1, beta1), 0.0)

    # layer2 + norm2 + relu
    h = jnp.dot(h.astype(mm_dtype), w2_ref[...],
                preferred_element_type=jnp.float32) + b2
    h = jnp.maximum(layernorm(h, g2, beta2), 0.0)

    # layer3 (full 128-lane MXU matmul on the padded w3), then keep only the
    # true out_dim columns and do a masked narrow store -- no padded HBM write.
    z = jnp.dot(h.astype(mm_dtype), w3_ref[...],
                preferred_element_type=jnp.float32)
    z = z[:, :out_dim] + b3
    o_ref[...] = (10.0 * jax.nn.sigmoid(z)).astype(o_ref.dtype)


def prepare_params(params, matmul_dtype=jnp.bfloat16):
    """One-time param prep (hoisted out of the forward): cast MXU operands and
    pad w3's output dim to a multiple of 128 lanes for a clean MXU matmul."""
    hid = params["w1"].shape[1]
    out_dim = params["w3"].shape[1]
    out_pad = _round_up(out_dim, 128)
    w3p = jnp.zeros((hid, out_pad), params["w3"].dtype).at[:, :out_dim].set(params["w3"])
    return {
        "w1": params["w1"].astype(matmul_dtype), "b1": params["b1"],
        "g1": params["g1"], "beta1": params["beta1"],
        "w2": params["w2"].astype(matmul_dtype), "b2": params["b2"],
        "g2": params["g2"], "beta2": params["beta2"],
        "w3": w3p.astype(matmul_dtype), "b3": params["b3"],
    }


def feedforward_nn(x, prepped, *, tile_b=2048):
    """x: (B, in_dim) float32. prepped: output of prepare_params().
    Returns (B, out_dim) float32."""
    w1, b1, g1, beta1 = prepped["w1"], prepped["b1"], prepped["g1"], prepped["beta1"]
    w2, b2, g2, beta2 = prepped["w2"], prepped["b2"], prepped["g2"], prepped["beta2"]
    w3, b3 = prepped["w3"], prepped["b3"]

    B, in_dim = x.shape
    hid = w1.shape[1]
    out_dim = b3.shape[1]          # true output width (w3 is lane-padded)

    tb, b_pad, n_steps = _batch_tiling(B, tile_b)
    if b_pad != B:
        x = jnp.pad(x, ((0, b_pad - B), (0, 0)))

    def resident(arr):  # whole-array block, same index every step -> stays in VMEM
        return pl.BlockSpec(arr.shape, lambda i: (0, 0))

    # Advisory cost estimate: real HBM bytes (narrow output), matmul flops,
    # sigmoid/rsqrt transcendentals.
    flops = 2 * b_pad * (in_dim * hid + hid * hid + hid * w3.shape[1]) + 12 * b_pad * hid
    transcendentals = b_pad * (out_dim + 2)
    param_bytes = sum(int(a.size) * a.dtype.itemsize
                      for a in (w1, b1, g1, beta1, w2, b2, g2, beta2, w3, b3))
    bytes_accessed = int(x.size) * x.dtype.itemsize + b_pad * out_dim * 4 + param_bytes

    out = pl.pallas_call(
        ffn_kernel,
        out_shape=jax.ShapeDtypeStruct((b_pad, out_dim), jnp.float32),
        grid=(n_steps,),
        in_specs=[
            pl.BlockSpec((tb, in_dim), lambda i: (i, 0)),   # x: batch-tiled stream
            resident(w1), resident(b1), resident(g1), resident(beta1),
            resident(w2), resident(b2), resident(g2), resident(beta2),
            resident(w3), resident(b3),
        ],
        out_specs=pl.BlockSpec((tb, out_dim), lambda i: (i, 0)),  # narrow, unpadded
        compiler_params=pltpu.CompilerParams(
            dimension_semantics=("parallel",)),
        cost_estimate=pl.CostEstimate(flops=flops,
                                      transcendentals=transcendentals,
                                      bytes_accessed=bytes_accessed),
    )(x, w1, b1, g1, beta1, w2, b2, g2, beta2, w3, b3)

    return out[:B] if b_pad != B else out


def init_params(key, in_dim, out_dim):
    """PyTorch-style init: Linear U(-1/sqrt(fan_in), 1/sqrt(fan_in)); LN gamma=1, beta=0.
    Weights stored (in, out); biases / affine stored (1, dim)."""
    ks = jax.random.split(key, 6)

    def linear(kw, kb, fan_in, fan_out):
        bound = 1.0 / jnp.sqrt(fan_in)
        w = jax.random.uniform(kw, (fan_in, fan_out), jnp.float32, -bound, bound)
        b = jax.random.uniform(kb, (1, fan_out), jnp.float32, -bound, bound)
        return w, b

    w1, b1 = linear(ks[0], ks[1], in_dim, 64)
    w2, b2 = linear(ks[2], ks[3], 64, 64)
    w3, b3 = linear(ks[4], ks[5], 64, out_dim)
    return {
        "w1": w1, "b1": b1,
        "g1": jnp.ones((1, 64), jnp.float32), "beta1": jnp.zeros((1, 64), jnp.float32),
        "w2": w2, "b2": b2,
        "g2": jnp.ones((1, 64), jnp.float32), "beta2": jnp.zeros((1, 64), jnp.float32),
        "w3": w3, "b3": b3,
    }


def reference_forward(x, p, matmul_dtype=jnp.float32):
    """Pure-JAX reference matching the PyTorch forward (optionally bf16 dot operands)."""
    eps = 1e-5

    def ln(h, g, b):
        mu = jnp.mean(h, axis=-1, keepdims=True)
        var = jnp.mean((h - mu) ** 2, axis=-1, keepdims=True)
        return (h - mu) / jnp.sqrt(var + eps) * g + b

    def mm(a, w):
        return jnp.dot(a.astype(matmul_dtype), w.astype(matmul_dtype),
                       preferred_element_type=jnp.float32)

    h = jax.nn.relu(ln(mm(x, p["w1"]) + p["b1"], p["g1"], p["beta1"]))
    h = jax.nn.relu(ln(mm(h, p["w2"]) + p["b2"], p["g2"], p["beta2"]))
    z = mm(h, p["w3"]) + p["b3"]
    return 10.0 * jax.nn.sigmoid(z)


if __name__ == "__main__":
    key = jax.random.PRNGKey(0)
    k_x, k_p, k_x2 = jax.random.split(key, 3)

    batch, in_dim, out_dim = 8, 16, 4
    x = jax.random.normal(k_x, (batch, in_dim), jnp.float32)
    params = init_params(k_p, in_dim, out_dim)
    ref_f32 = reference_forward(x, params)

    # Exact-semantics check: f32 MXU path matches the PyTorch reference tightly.
    prep_f32 = prepare_params(params, matmul_dtype=jnp.float32)
    out_f32 = jax.block_until_ready(feedforward_nn(x, prep_f32))
    assert out_f32.shape == (batch, out_dim)
    assert jnp.allclose(out_f32, ref_f32, atol=1e-4, rtol=1e-4)

    # Optimized path: bf16 MXU operands with f32 accumulation (v6e/v7x native).
    prep_bf16 = prepare_params(params, matmul_dtype=jnp.bfloat16)
    out_bf16 = jax.block_until_ready(feedforward_nn(x, prep_bf16))
    ref_bf16 = reference_forward(x, params, matmul_dtype=jnp.bfloat16)
    assert out_bf16.shape == (batch, out_dim)
    assert jnp.allclose(out_bf16, ref_bf16, atol=2e-2, rtol=2e-2)
    assert jnp.allclose(out_bf16, ref_f32, atol=0.5, rtol=0.1)  # loose sanity vs f32 spec

    # Multi-tile path: small tile to exercise the grid, even-step rounding and
    # batch padding (B=40, tile_b=16 -> 4 steps of 16 rows, 24 padded rows).
    batch2 = 40
    x2 = jax.random.normal(k_x2, (batch2, in_dim), jnp.float32)
    ref2 = reference_forward(x2, params)
    out2 = jax.block_until_ready(feedforward_nn(x2, prep_f32, tile_b=16))
    assert out2.shape == (batch2, out_dim)
    assert jnp.allclose(out2, ref2, atol=1e-4, rtol=1e-4)

    print("KERNEL_OK")
</pallas_src>

<mosaic_0001>
module attributes {stable_mosaic.version = 11 : i64} {
  func.func @ffn_kernel(%arg0: i32, %arg1: memref<8x16xf32, #tpu.memory_space<vmem>>, %arg2: memref<16x64xf32, #tpu.memory_space<vmem>>, %arg3: memref<1x64xf32, #tpu.memory_space<vmem>>, %arg4: memref<1x64xf32, #tpu.memory_space<vmem>>, %arg5: memref<1x64xf32, #tpu.memory_space<vmem>>, %arg6: memref<64x64xf32, #tpu.memory_space<vmem>>, %arg7: memref<1x64xf32, #tpu.memory_space<vmem>>, %arg8: memref<1x64xf32, #tpu.memory_space<vmem>>, %arg9: memref<1x64xf32, #tpu.memory_space<vmem>>, %arg10: memref<64x128xf32, #tpu.memory_space<vmem>>, %arg11: memref<1x4xf32, #tpu.memory_space<vmem>>, %arg12: memref<8x4xf32, #tpu.memory_space<vmem>>) attributes {dimension_semantics = [#tpu.dimension_semantics<parallel>], iteration_bounds = array<i64: 1>, scalar_prefetch = 0 : i64, scratch_operands = 0 : i64, tpu.core_type = #tpu.core_type<tc>, window_params = [{transform_indices = @transform_0, window_bounds = array<i64: 8, 16>}, {pipeline_mode = #tpu.pipeline_mode<synchronous>, transform_indices = @transform_1, window_bounds = array<i64: 16, 64>}, {pipeline_mode = #tpu.pipeline_mode<synchronous>, transform_indices = @transform_2, window_bounds = array<i64: 1, 64>}, {pipeline_mode = #tpu.pipeline_mode<synchronous>, transform_indices = @transform_3, window_bounds = array<i64: 1, 64>}, {pipeline_mode = #tpu.pipeline_mode<synchronous>, transform_indices = @transform_4, window_bounds = array<i64: 1, 64>}, {pipeline_mode = #tpu.pipeline_mode<synchronous>, transform_indices = @transform_5, window_bounds = array<i64: 64, 64>}, {pipeline_mode = #tpu.pipeline_mode<synchronous>, transform_indices = @transform_6, window_bounds = array<i64: 1, 64>}, {pipeline_mode = #tpu.pipeline_mode<synchronous>, transform_indices = @transform_7, window_bounds = array<i64: 1, 64>}, {pipeline_mode = #tpu.pipeline_mode<synchronous>, transform_indices = @transform_8, window_bounds = array<i64: 1, 64>}, {pipeline_mode = #tpu.pipeline_mode<synchronous>, transform_indices = @transform_9, window_bounds = array<i64: 64, 128>}, {pipeline_mode = #tpu.pipeline_mode<synchronous>, transform_indices = @transform_10, window_bounds = array<i64: 1, 4>}, {transform_indices = @transform_11, window_bounds = array<i64: 8, 4>}]} {
    %c0 = arith.constant 0 : index
    %c0_0 = arith.constant 0 : index
    %0 = vector.load %arg3[%c0, %c0_0] : memref<1x64xf32, #tpu.memory_space<vmem>>, vector<1x64xf32>
    %c0_1 = arith.constant 0 : index
    %c0_2 = arith.constant 0 : index
    %1 = vector.load %arg4[%c0_1, %c0_2] : memref<1x64xf32, #tpu.memory_space<vmem>>, vector<1x64xf32>
    %c0_3 = arith.constant 0 : index
    %c0_4 = arith.constant 0 : index
    %2 = vector.load %arg5[%c0_3, %c0_4] : memref<1x64xf32, #tpu.memory_space<vmem>>, vector<1x64xf32>
    %c0_5 = arith.constant 0 : index
    %c0_6 = arith.constant 0 : index
    %3 = vector.load %arg7[%c0_5, %c0_6] : memref<1x64xf32, #tpu.memory_space<vmem>>, vector<1x64xf32>
    %c0_7 = arith.constant 0 : index
    %c0_8 = arith.constant 0 : index
    %4 = vector.load %arg8[%c0_7, %c0_8] : memref<1x64xf32, #tpu.memory_space<vmem>>, vector<1x64xf32>
    %c0_9 = arith.constant 0 : index
    %c0_10 = arith.constant 0 : index
    %5 = vector.load %arg9[%c0_9, %c0_10] : memref<1x64xf32, #tpu.memory_space<vmem>>, vector<1x64xf32>
    %c0_11 = arith.constant 0 : index
    %c0_12 = arith.constant 0 : index
    %6 = vector.load %arg11[%c0_11, %c0_12] : memref<1x4xf32, #tpu.memory_space<vmem>>, vector<1x4xf32>
    %c0_13 = arith.constant 0 : index
    %c0_14 = arith.constant 0 : index
    %7 = vector.load %arg1[%c0_13, %c0_14] : memref<8x16xf32, #tpu.memory_space<vmem>>, vector<8x16xf32>
    %c0_15 = arith.constant 0 : index
    %c0_16 = arith.constant 0 : index
    %8 = vector.load %arg2[%c0_15, %c0_16] : memref<16x64xf32, #tpu.memory_space<vmem>>, vector<16x64xf32>
    %cst = arith.constant dense<0.000000e+00> : vector<8x64xf32>
    %9 = tpu.matmul %7, %8, %cst {dimension_numbers = #tpu.dot_dimension_numbers<[1], [0], [0], [1], [0, 0, 1, 1], [], []>} : vector<8x16xf32>, vector<16x64xf32>, vector<8x64xf32> -> vector<8x64xf32>
    %10 = vector.broadcast %0 : vector<1x64xf32> to vector<8x64xf32>
    %11 = arith.addf %9, %10 : vector<8x64xf32>
    %cst_17 = arith.constant dense<0.000000e+00> : vector<8xf32>
    %12 = vector.multi_reduction <add>, %11, %cst_17 [1] : vector<8x64xf32> to vector<8xf32>
    %13 = vector.shape_cast %12 : vector<8xf32> to vector<8x1xf32>
    %cst_18 = arith.constant 1.562500e-02 : f32
    %14 = vector.broadcast %cst_18 : f32 to vector<8x1xf32>
    %15 = arith.mulf %13, %14 : vector<8x1xf32>
    %16 = arith.mulf %11, %11 : vector<8x64xf32>
    %cst_19 = arith.constant dense<0.000000e+00> : vector<8xf32>
    %17 = vector.multi_reduction <add>, %16, %cst_19 [1] : vector<8x64xf32> to vector<8xf32>
    %18 = vector.shape_cast %17 : vector<8xf32> to vector<8x1xf32>
    %cst_20 = arith.constant 1.562500e-02 : f32
    %19 = vector.broadcast %cst_20 : f32 to vector<8x1xf32>
    %20 = arith.mulf %18, %19 : vector<8x1xf32>
    %21 = arith.mulf %15, %15 : vector<8x1xf32>
    %22 = arith.subf %20, %21 : vector<8x1xf32>
    %cst_21 = arith.constant 0.000000e+00 : f32
    %23 = vector.broadcast %cst_21 : f32 to vector<8x1xf32>
    %24 = arith.maximumf %22, %23 : vector<8x1xf32>
    %25 = vector.broadcast %15 : vector<8x1xf32> to vector<8x64xf32>
    %26 = arith.subf %11, %25 : vector<8x64xf32>
    %cst_22 = arith.constant 9.99999974E-6 : f32
    %27 = vector.broadcast %cst_22 : f32 to vector<8x1xf32>
    %28 = arith.addf %24, %27 : vector<8x1xf32>
    %29 = math.rsqrt %28 : vector<8x1xf32>
    %30 = vector.broadcast %29 : vector<8x1xf32> to vector<8x64xf32>
    %31 = arith.mulf %26, %30 : vector<8x64xf32>
    %32 = vector.broadcast %1 : vector<1x64xf32> to vector<8x64xf32>
    %33 = arith.mulf %31, %32 : vector<8x64xf32>
    %34 = vector.broadcast %2 : vector<1x64xf32> to vector<8x64xf32>
    %35 = arith.addf %33, %34 : vector<8x64xf32>
    %cst_23 = arith.constant 0.000000e+00 : f32
    %36 = vector.broadcast %cst_23 : f32 to vector<8x64xf32>
    %37 = arith.maximumf %35, %36 : vector<8x64xf32>
    %c0_24 = arith.constant 0 : index
    %c0_25 = arith.constant 0 : index
    %38 = vector.load %arg6[%c0_24, %c0_25] : memref<64x64xf32, #tpu.memory_space<vmem>>, vector<64x64xf32>
    %cst_26 = arith.constant dense<0.000000e+00> : vector<8x64xf32>
    %39 = tpu.matmul %37, %38, %cst_26 {dimension_numbers = #tpu.dot_dimension_numbers<[1], [0], [0], [1], [0, 0, 1, 1], [], []>} : vector<8x64xf32>, vector<64x64xf32>, vector<8x64xf32> -> vector<8x64xf32>
    %40 = vector.broadcast %3 : vector<1x64xf32> to vector<8x64xf32>
    %41 = arith.addf %39, %40 : vector<8x64xf32>
    %cst_27 = arith.constant dense<0.000000e+00> : vector<8xf32>
    %42 = vector.multi_reduction <add>, %41, %cst_27 [1] : vector<8x64xf32> to vector<8xf32>
    %43 = vector.shape_cast %42 : vector<8xf32> to vector<8x1xf32>
    %cst_28 = arith.constant 1.562500e-02 : f32
    %44 = vector.broadcast %cst_28 : f32 to vector<8x1xf32>
    %45 = arith.mulf %43, %44 : vector<8x1xf32>
    %46 = arith.mulf %41, %41 : vector<8x64xf32>
    %cst_29 = arith.constant dense<0.000000e+00> : vector<8xf32>
    %47 = vector.multi_reduction <add>, %46, %cst_29 [1] : vector<8x64xf32> to vector<8xf32>
    %48 = vector.shape_cast %47 : vector<8xf32> to vector<8x1xf32>
    %cst_30 = arith.constant 1.562500e-02 : f32
    %49 = vector.broadcast %cst_30 : f32 to vector<8x1xf32>
    %50 = arith.mulf %48, %49 : vector<8x1xf32>
    %51 = arith.mulf %45, %45 : vector<8x1xf32>
    %52 = arith.subf %50, %51 : vector<8x1xf32>
    %cst_31 = arith.constant 0.000000e+00 : f32
    %53 = vector.broadcast %cst_31 : f32 to vector<8x1xf32>
    %54 = arith.maximumf %52, %53 : vector<8x1xf32>
    %55 = vector.broadcast %45 : vector<8x1xf32> to vector<8x64xf32>
    %56 = arith.subf %41, %55 : vector<8x64xf32>
    %cst_32 = arith.constant 9.99999974E-6 : f32
    %57 = vector.broadcast %cst_32 : f32 to vector<8x1xf32>
    %58 = arith.addf %54, %57 : vector<8x1xf32>
    %59 = math.rsqrt %58 : vector<8x1xf32>
    %60 = vector.broadcast %59 : vector<8x1xf32> to vector<8x64xf32>
    %61 = arith.mulf %56, %60 : vector<8x64xf32>
    %62 = vector.broadcast %4 : vector<1x64xf32> to vector<8x64xf32>
    %63 = arith.mulf %61, %62 : vector<8x64xf32>
    %64 = vector.broadcast %5 : vector<1x64xf32> to vector<8x64xf32>
    %65 = arith.addf %63, %64 : vector<8x64xf32>
    %cst_33 = arith.constant 0.000000e+00 : f32
    %66 = vector.broadcast %cst_33 : f32 to vector<8x64xf32>
    %67 = arith.maximumf %65, %66 : vector<8x64xf32>
    %c0_34 = arith.constant 0 : index
    %c0_35 = arith.constant 0 : index
    %68 = vector.load %arg10[%c0_34, %c0_35] : memref<64x128xf32, #tpu.memory_space<vmem>>, vector<64x128xf32>
    %cst_36 = arith.constant dense<0.000000e+00> : vector<8x128xf32>
    %69 = tpu.matmul %67, %68, %cst_36 {dimension_numbers = #tpu.dot_dimension_numbers<[1], [0], [0], [1], [0, 0, 1, 1], [], []>} : vector<8x64xf32>, vector<64x128xf32>, vector<8x128xf32> -> vector<8x128xf32>
    %70 = vector.extract_strided_slice %69 {offsets = [0, 0], sizes = [8, 4], strides = [1, 1]} : vector<8x128xf32> to vector<8x4xf32>
    %71 = vector.broadcast %6 : vector<1x4xf32> to vector<8x4xf32>
    %72 = arith.addf %70, %71 : vector<8x4xf32>
    %73 = arith.negf %72 : vector<8x4xf32>
    %74 = math.exp %73 : vector<8x4xf32>
    %cst_37 = arith.constant 1.000000e+00 : f32
    %75 = vector.broadcast %cst_37 : f32 to vector<8x4xf32>
    %76 = arith.addf %75, %74 : vector<8x4xf32>
    %77 = arith.divf %75, %76 : vector<8x4xf32>
    %cst_38 = arith.constant 1.000000e+01 : f32
    %78 = vector.broadcast %cst_38 : f32 to vector<8x4xf32>
    %79 = arith.mulf %78, %77 : vector<8x4xf32>
    %c0_39 = arith.constant 0 : index
    %c0_40 = arith.constant 0 : index
    %80 = vector.load %arg12[%c0_39, %c0_40] : memref<8x4xf32, #tpu.memory_space<vmem>>, vector<8x4xf32>
    tpu.vector_store %arg12[%c0_39, %c0_40], %79 {strides = array<i32>} : memref<8x4xf32, #tpu.memory_space<vmem>>, vector<8x4xf32>,
    return
  }
  func.func @transform_0(%arg0: i32) -> (i32, i32) {
    %c0_i32 = arith.constant 0 : i32
    %c0_i32_0 = arith.constant 0 : i32
    return %arg0, %c0_i32 : i32, i32
  }
  func.func @transform_1(%arg0: i32) -> (i32, i32) {
    %c0_i32 = arith.constant 0 : i32
    %c0_i32_0 = arith.constant 0 : i32
    %c0_i32_1 = arith.constant 0 : i32
    return %c0_i32, %c0_i32_0 : i32, i32
  }
  func.func @transform_2(%arg0: i32) -> (i32, i32) {
    %c0_i32 = arith.constant 0 : i32
    %c0_i32_0 = arith.constant 0 : i32
    %c0_i32_1 = arith.constant 0 : i32
    return %c0_i32, %c0_i32_0 : i32, i32
  }
  func.func @transform_3(%arg0: i32) -> (i32, i32) {
    %c0_i32 = arith.constant 0 : i32
    %c0_i32_0 = arith.constant 0 : i32
    %c0_i32_1 = arith.constant 0 : i32
    return %c0_i32, %c0_i32_0 : i32, i32
  }
  func.func @transform_4(%arg0: i32) -> (i32, i32) {
    %c0_i32 = arith.constant 0 : i32
    %c0_i32_0 = arith.constant 0 : i32
    %c0_i32_1 = arith.constant 0 : i32
    return %c0_i32, %c0_i32_0 : i32, i32
  }
  func.func @transform_5(%arg0: i32) -> (i32, i32) {
    %c0_i32 = arith.constant 0 : i32
    %c0_i32_0 = arith.constant 0 : i32
    %c0_i32_1 = arith.constant 0 : i32
    return %c0_i32, %c0_i32_0 : i32, i32
  }
  func.func @transform_6(%arg0: i32) -> (i32, i32) {
    %c0_i32 = arith.constant 0 : i32
    %c0_i32_0 = arith.constant 0 : i32
    %c0_i32_1 = arith.constant 0 : i32
    return %c0_i32, %c0_i32_0 : i32, i32
  }
  func.func @transform_7(%arg0: i32) -> (i32, i32) {
    %c0_i32 = arith.constant 0 : i32
    %c0_i32_0 = arith.constant 0 : i32
    %c0_i32_1 = arith.constant 0 : i32
    return %c0_i32, %c0_i32_0 : i32, i32
  }
  func.func @transform_8(%arg0: i32) -> (i32, i32) {
    %c0_i32 = arith.constant 0 : i32
    %c0_i32_0 = arith.constant 0 : i32
    %c0_i32_1 = arith.constant 0 : i32
    return %c0_i32, %c0_i32_0 : i32, i32
  }
  func.func @transform_9(%arg0: i32) -> (i32, i32) {
    %c0_i32 = arith.constant 0 : i32
    %c0_i32_0 = arith.constant 0 : i32
    %c0_i32_1 = arith.constant 0 : i32
    return %c0_i32, %c0_i32_0 : i32, i32
  }
  func.func @transform_10(%arg0: i32) -> (i32, i32) {
    %c0_i32 = arith.constant 0 : i32
    %c0_i32_0 = arith.constant 0 : i32
    %c0_i32_1 = arith.constant 0 : i32
    return %c0_i32, %c0_i32_0 : i32, i32
  }
  func.func @transform_11(%arg0: i32) -> (i32, i32) {
    %c0_i32 = arith.constant 0 : i32
    %c0_i32_0 = arith.constant 0 : i32
    return %arg0, %c0_i32 : i32, i32
  }
}

</mosaic_0001>

<llo_original>
// kernel: tpu_custom_call.1
$region0: #{tpu_custom_call.1}
  #allocation0 [shape = 'u32[]', space=smem, size = 0x4, offset = 0x4, fixed_abs, tag = 'smem constant byte address 0x4 - core index']
  #allocation1 [shape = 'u32[144,128]{1,0:T(1,128)}', space=vmem, size = 0x12000, scoped, tag = 'internal scratch']
  %s0 = inlined_call_operand.hbm [shape: f32[8,16], index: 0, kind: input, shape index: {}]
  %s1 = inlined_call_operand.hbm [shape: f32[16,64], index: 1, kind: input, shape index: {}]
  %s2 = inlined_call_operand.vmem [shape: f32[1,64], index: 2, kind: input, shape index: {}]
  %s3 = inlined_call_operand.vmem [shape: f32[1,64], index: 3, kind: input, shape index: {}]
  %s4 = inlined_call_operand.vmem [shape: f32[1,64], index: 4, kind: input, shape index: {}]
  %s5 = inlined_call_operand.hbm [shape: f32[64,64], index: 5, kind: input, shape index: {}]
  %s6 = inlined_call_operand.vmem [shape: f32[1,64], index: 6, kind: input, shape index: {}]
  %s7 = inlined_call_operand.vmem [shape: f32[1,64], index: 7, kind: input, shape index: {}]
  %s8 = inlined_call_operand.vmem [shape: f32[1,64], index: 8, kind: input, shape index: {}]
  %s9 = inlined_call_operand.hbm [shape: f32[64,128], index: 9, kind: input, shape index: {}]
  %s10 = inlined_call_operand.vmem [shape: f32[1,4], index: 10, kind: input, shape index: {}]
  %s11 = inlined_call_operand.vmem [shape: f32[8,4], index: 11, kind: output, shape index: {}]
  %s12 = sld [smem:[#allocation0]]
  $region70: #{tpu_custom_call.1} parent=0
    _
  %s14 = ssub.s32 1, %s12
  %s15 = scalar_select 0, %s14, %s12
  $region1: #{tpu_custom_call.1} parent=0
    #allocation2 [shape = 'u8[4096]{0}', space=vmem, size = 0x1000, scoped, tag = 'input window, operand 0, single buffered']
    #allocation3 [shape = 's32[1]{0}', space=sflag, size = 0x4, scoped, tag = 'scoped memory for tpu_custom_call.1']
    #allocation4 [shape = 'u8[8192]{0}', space=vmem, size = 0x2000, scoped, tag = 'input window, operand 1, single buffered']
    #allocation5 [shape = 's32[1]{0}', space=sflag, size = 0x4, scoped, tag = 'scoped memory for tpu_custom_call.1']
    #allocation6 [shape = 'u8[32768]{0}', space=vmem, size = 0x8000, scoped, tag = 'input window, operand 5, single buffered']
    #allocation7 [shape = 'u8[32768]{0}', space=vmem, size = 0x8000, scoped, tag = 'input window, operand 9, single buffered']
    #allocation8 [shape = 's32[1]{0}', space=sflag, size = 0x4, scoped, tag = 'scoped memory for tpu_custom_call.1']
    %16 = vsyncpa [#allocation3], 0
    %17 = vsyncpa [#allocation5], 0
    %18 = vsyncpa [#allocation8], 0
    // Predicated region
    $region2: #{tpu_custom_call.1} parent=1 // pred_check
      _
    $region3: #{tpu_custom_call.1} parent=1 // pred_check_branch
      %20 = sbr.rel (0) target = $region5
    $region4: #{tpu_custom_call.1} parent=1 // pred_region
      %s22 = ssub.s32 128, 128
      %23 = vsyncadd [#allocation3], %s22
      %s25 = sshll.u32 [#allocation2], 4
      %s26 = int_to_ptr.vmem [resolvable:$true] %s25
      %28 = dma.hbm_to_vmem [thread:$0]  %s0, 128, %s26, [#allocation3]
    $region5: #{tpu_custom_call.1} parent=1 // pred_fallthru
      _
    // Predicated region
    $region6: #{tpu_custom_call.1} parent=1 // pred_check
      _
    $region7: #{tpu_custom_call.1} parent=1 // pred_check_branch
      %30 = sbr.rel (0) target = $region9
    $region8: #{tpu_custom_call.1} parent=1 // pred_region
      %s32 = ssub.s32 256, 256
      %33 = vsyncadd [#allocation5], %s32
      %s34 = sshll.u32 [#allocation4], 4
      %s35 = int_to_ptr.vmem [resolvable:$true] %s34
      %40 = dma.hbm_to_vmem [thread:$0]  %s1, 256, %s35, [#allocation5], 128, 128, 8
    $region9: #{tpu_custom_call.1} parent=1 // pred_fallthru
      _
    // Predicated region
    $region10: #{tpu_custom_call.1} parent=1 // pred_check
      _
    $region11: #{tpu_custom_call.1} parent=1 // pred_check_branch
      %42 = sbr.rel (0) target = $region13
    $region12: #{tpu_custom_call.1} parent=1 // pred_region
      _
    $region13: #{tpu_custom_call.1} parent=1 // pred_fallthru
      _
    // Predicated region
    $region14: #{tpu_custom_call.1} parent=1 // pred_check
      _
    $region15: #{tpu_custom_call.1} parent=1 // pred_check_branch
      %44 = sbr.rel (0) target = $region17
    $region16: #{tpu_custom_call.1} parent=1 // pred_region
      _
    $region17: #{tpu_custom_call.1} parent=1 // pred_fallthru
      _
    // Predicated region
    $region18: #{tpu_custom_call.1} parent=1 // pred_check
      _
    $region19: #{tpu_custom_call.1} parent=1 // pred_check_branch
      %46 = sbr.rel (0) target = $region21
    $region20: #{tpu_custom_call.1} parent=1 // pred_region
      _
    $region21: #{tpu_custom_call.1} parent=1 // pred_fallthru
      _
    // Predicated region
    $region22: #{tpu_custom_call.1} parent=1 // pred_check
      _
    $region23: #{tpu_custom_call.1} parent=1 // pred_check_branch
      %48 = sbr.rel (0) target = $region25
    $region24: #{tpu_custom_call.1} parent=1 // pred_region
      %s50 = ssub.s32 1024, 1024
      %51 = vsyncadd [#allocation5], %s50
      %s52 = sshll.u32 [#allocation6], 4
      %s53 = int_to_ptr.vmem [resolvable:$true] %s52
      %58 = dma.hbm_to_vmem [thread:$0]  %s5, 1024, %s53, [#allocation5], 128, 128, 8
    $region25: #{tpu_custom_call.1} parent=1 // pred_fallthru
      _
    // Predicated region
    $region26: #{tpu_custom_call.1} parent=1 // pred_check
      _
    $region27: #{tpu_custom_call.1} parent=1 // pred_check_branch
      %60 = sbr.rel (0) target = $region29
    $region28: #{tpu_custom_call.1} parent=1 // pred_region
      _
    $region29: #{tpu_custom_call.1} parent=1 // pred_fallthru
      _
    // Predicated region
    $region30: #{tpu_custom_call.1} parent=1 // pred_check
      _
    $region31: #{tpu_custom_call.1} parent=1 // pred_check_branch
      %62 = sbr.rel (0) target = $region33
    $region32: #{tpu_custom_call.1} parent=1 // pred_region
      _
    $region33: #{tpu_custom_call.1} parent=1 // pred_fallthru
      _
    // Predicated region
    $region34: #{tpu_custom_call.1} parent=1 // pred_check
      _
    $region35: #{tpu_custom_call.1} parent=1 // pred_check_branch
      %64 = sbr.rel (0) target = $region37
    $region36: #{tpu_custom_call.1} parent=1 // pred_region
      _
    $region37: #{tpu_custom_call.1} parent=1 // pred_fallthru
      _
    // Predicated region
    $region38: #{tpu_custom_call.1} parent=1 // pred_check
      _
    $region39: #{tpu_custom_call.1} parent=1 // pred_check_branch
      %66 = sbr.rel (0) target = $region41
    $region40: #{tpu_custom_call.1} parent=1 // pred_region
      %s68 = ssub.s32 1024, 1024
      %69 = vsyncadd [#allocation8], %s68
      %s70 = sshll.u32 [#allocation7], 4
      %s71 = int_to_ptr.vmem [resolvable:$true] %s70
      %76 = dma.hbm_to_vmem [thread:$0]  %s9, 1024, %s71, [#allocation8], 128, 128, 8
    $region41: #{tpu_custom_call.1} parent=1 // pred_fallthru
      _
    // Predicated region
    $region42: #{tpu_custom_call.1} parent=1 // pred_check
      _
    $region43: #{tpu_custom_call.1} parent=1 // pred_check_branch
      %78 = sbr.rel (0) target = $region45
    $region44: #{tpu_custom_call.1} parent=1 // pred_region
      _
    $region45: #{tpu_custom_call.1} parent=1 // pred_fallthru
      _
    // Predicated region
    $region46: #{tpu_custom_call.1} parent=1 // pred_check
      _
    $region47: #{tpu_custom_call.1} parent=1 // pred_check_branch
      %80 = sbr.rel (0) target = $region49
    $region48: #{tpu_custom_call.1} parent=1 // pred_region
      %81 = dma.done [#allocation3], 128
    $region49: #{tpu_custom_call.1} parent=1 // pred_fallthru
      _
    // Predicated region
    $region50: #{tpu_custom_call.1} parent=1 // pred_check
      _
    $region51: #{tpu_custom_call.1} parent=1 // pred_check_branch
      %83 = sbr.rel (0) target = $region53
    $region52: #{tpu_custom_call.1} parent=1 // pred_region
      %84 = dma.done [#allocation5], 256
    $region53: #{tpu_custom_call.1} parent=1 // pred_fallthru
      _
    // Predicated region
    $region54: #{tpu_custom_call.1} parent=1 // pred_check
      _
    $region55: #{tpu_custom_call.1} parent=1 // pred_check_branch
      %86 = sbr.rel (0) target = $region57
    $region56: #{tpu_custom_call.1} parent=1 // pred_region
      %87 = dma.done [#allocation5], 1024
    $region57: #{tpu_custom_call.1} parent=1 // pred_fallthru
      _
    // Predicated region
    $region58: #{tpu_custom_call.1} parent=1 // pred_check
      _
    $region59: #{tpu_custom_call.1} parent=1 // pred_check_branch
      %89 = sbr.rel (0) target = $region61
    $region60: #{tpu_custom_call.1} parent=1 // pred_region
      %90 = dma.done [#allocation8], 1024
    $region61: #{tpu_custom_call.1} parent=1 // pred_fallthru
      _
    %v91 = vld [vmem:[%s2] sm:$0x1]
    %v92 = vld [vmem:[%s3] sm:$0x1]
    %v93 = vld [vmem:[%s4] sm:$0x1]
    %v94 = vld [vmem:[%s6] sm:$0x1]
    %v95 = vld [vmem:[%s7] sm:$0x1]
    %v96 = vld [vmem:[%s8] sm:$0x1]
    %v97 = vld [vmem:[%s10] sm:$0x1]
    %v98 = vld [vmem:[#allocation2] sm:$0xff]
    %v99 = vld [vmem:[#allocation4] sm:$0xff]
    %v100 = vld [vmem:[#allocation4 + $0x8] sm:$0xff]
    %v102 = vlaneseq
    %v103 = vshrl.u32 %v102, 7
    %v104 = vsub.s32 0, %v103
    %v105 = vrot.slane %v91, %v104
    %vm107 = vcmask 130048
    %v109 = vsel %vm107, %v98, 0
    %111 = vmatprep.subr.mxu0 0.0
    %112 = vmatpush1.msra.mxu0 %v99
    %113 = vmatprep.subr.mxu0 0.0
    %114 = vmatpush1.msra.mxu0 %v100
    %115 = vmatprep.subr.mxu0 0.0
    %116 = vmatpush1.msra.mxu0 0.0
    %117 = vmatprep.subr.mxu0 0.0
    %118 = vmatpush1.msra.mxu0 0.0
    %119 = vmatprep.subr.mxu0 0.0
    %120 = vmatpush1.msra.mxu0 0.0
    %121 = vmatprep.subr.mxu0 0.0
    %122 = vmatpush1.msra.mxu0 0.0
    %123 = vmatprep.subr.mxu0 0.0
    %124 = vmatpush1.msra.mxu0 0.0
    %125 = vmatprep.subr.mxu0 0.0
    %126 = vmatpush1.msra.mxu0 0.0
    %127 = vmatprep.subr.mxu0 0.0
    %128 = vmatpush1.msra.mxu0 0.0
    %129 = vmatprep.subr.mxu0 0.0
    %130 = vmatpush1.msra.mxu0 0.0
    %131 = vmatprep.subr.mxu0 0.0
    %132 = vmatpush1.msra.mxu0 0.0
    %133 = vmatprep.subr.mxu0 0.0
    %134 = vmatpush1.msra.mxu0 0.0
    %135 = vmatprep.subr.mxu0 0.0
    %136 = vmatpush1.msra.mxu0 0.0
    %137 = vmatprep.subr.mxu0 0.0
    %138 = vmatpush1.msra.mxu0 0.0
    %139 = vmatprep.subr.mxu0 0.0
    %140 = vmatpush1.msra.mxu0 0.0
    %141 = vmatprep.subr.mxu0 0.0
    %142 = vmatpush1.msra.mxu0 0.0
    %143 = vmatprep.subr.mxu0 0.0
    %144 = vmatpush1.msra.mxu0 0.0
    %145 = vmatprep.subr.mxu0 0.0
    %146 = vmatpush1.msra.mxu0 0.0
    %147 = vmatprep.subr.mxu0 0.0
    %148 = vmatpush1.msra.mxu0 0.0
    %149 = vmatprep.subr.mxu0 0.0
    %150 = vmatpush1.msra.mxu0 0.0
    %151 = vmatprep.subr.mxu0 0.0
    %152 = vmatpush1.msra.mxu0 0.0
    %153 = vmatprep.subr.mxu0 0.0
    %154 = vmatpush1.msra.mxu0 0.0
    %155 = vmatprep.subr.mxu0 0.0
    %156 = vmatpush1.msra.mxu0 0.0
    %157 = vmatprep.subr.mxu0 0.0
    %158 = vmatpush1.msra.mxu0 0.0
    %159 = vmatprep.subr.mxu0 0.0
    %160 = vmatpush1.msra.mxu0 0.0
    %161 = vmatprep.subr.mxu0 0.0
    %162 = vmatpush1.msra.mxu0 0.0
    %163 = vmatprep.subr.mxu0 0.0
    %164 = vmatpush1.msra.mxu0 0.0
    %165 = vmatprep.subr.mxu0 0.0
    %166 = vmatpush1.msra.mxu0 0.0
    %167 = vmatprep.subr.mxu0 0.0
    %168 = vmatpush1.msra.mxu0 0.0
    %169 = vmatprep.subr.mxu0 0.0
    %170 = vmatpush1.msra.mxu0 0.0
    %171 = vmatprep.subr.mxu0 0.0
    %172 = vmatpush1.msra.mxu0 0.0
    %173 = vmatprep.subr.mxu0 0.0
    %174 = vmatpush1.msra.mxu0 0.0
    %175 = vmatprep.mubr.f32.mxu0 0.0
    %176 = vmatmul.mubr.f32.gmra.mrb[0].mxu0 %v109
    %v177 = vpop.f32.mrb[0].mxu0
    %v178 = vadd.f32 %v105, %v177
    %v179 = vpop.f32.mrb[0].mxu0
    %180 = vdwg.mxu0
    %vm181 = vcmask 523264
    %v182 = vsel %vm181, %v178, 0.0
    %183 = vadd.xlane.f32.xlu0 %v182
    %v184 = vpop.xlane.xlu0 %183
    %v185 = vmul.f32 %v184, 0.015625
    %v186 = vmul.f32 %v178, %v178
    %v187 = vsel %vm181, %v186, 0.0
    %188 = vadd.xlane.f32.xlu0 %v187
    %v189 = vpop.xlane.xlu0 %188
    %v190 = vmul.f32 %v189, 0.015625
    %v191 = vmul.f32 %v185, %v185
    %v192 = vsub.f32 %v190, %v191
    %v193 = vmax.f32 %v192, 0.0
    %v194 = vsub.f32 %v178, %v185
    %v195 = vadd.f32 %v193, 1e-05
    %v196 = vrsqrt.pop %v195
    %v197 = vmul.f32 %v194, %v196
    %v199 = vlaneseq
    %v200 = vshrl.u32 %v199, 7
    %v201 = vsub.s32 0, %v200
    %v202 = vrot.slane %v92, %v201
    %v204 = vmul.f32 %v197, %v202
    %v206 = vlaneseq
    %v207 = vshrl.u32 %v206, 7
    %v208 = vsub.s32 0, %v207
    %v209 = vrot.slane %v93, %v208
    %v211 = vadd.f32 %v204, %v209
    %v212 = vmax.f32 %v211, 0.0
    %v213 = vld [vmem:[#allocation6] sm:$0xff]
    %v214 = vld [vmem:[#allocation6 + $0x8] sm:$0xff]
    %v215 = vld [vmem:[#allocation6 + $0x10] sm:$0xff]
    %v216 = vld [vmem:[#allocation6 + $0x18] sm:$0xff]
    %v217 = vld [vmem:[#allocation6 + $0x20] sm:$0xff]
    %v218 = vld [vmem:[#allocation6 + $0x28] sm:$0xff]
    %v219 = vld [vmem:[#allocation6 + $0x30] sm:$0xff]
    %v220 = vld [vmem:[#allocation6 + $0x38] sm:$0xff]
    %v222 = vlaneseq
    %v223 = vshrl.u32 %v222, 7
    %v224 = vsub.s32 0, %v223
    %v225 = vrot.slane %v94, %v224
    %v228 = vsel %vm181, %v212, 0
    %230 = vmatprep.subr.mxu0 0.0
    %231 = vmatpush1.msra.mxu0 %v213
    %232 = vmatprep.subr.mxu0 0.0
    %233 = vmatpush1.msra.mxu0 %v214
    %234 = vmatprep.subr.mxu0 0.0
    %235 = vmatpush1.msra.mxu0 %v215
    %236 = vmatprep.subr.mxu0 0.0
    %237 = vmatpush1.msra.mxu0 %v216
    %238 = vmatprep.subr.mxu0 0.0
    %239 = vmatpush1.msra.mxu0 %v217
    %240 = vmatprep.subr.mxu0 0.0
    %241 = vmatpush1.msra.mxu0 %v218
    %242 = vmatprep.subr.mxu0 0.0
    %243 = vmatpush1.msra.mxu0 %v219
    %244 = vmatprep.subr.mxu0 0.0
    %245 = vmatpush1.msra.mxu0 %v220
    %246 = vmatprep.subr.mxu0 0.0
    %247 = vmatpush1.msra.mxu0 0.0
    %248 = vmatprep.subr.mxu0 0.0
    %249 = vmatpush1.msra.mxu0 0.0
    %250 = vmatprep.subr.mxu0 0.0
    %251 = vmatpush1.msra.mxu0 0.0
    %252 = vmatprep.subr.mxu0 0.0
    %253 = vmatpush1.msra.mxu0 0.0
    %254 = vmatprep.subr.mxu0 0.0
    %255 = vmatpush1.msra.mxu0 0.0
    %256 = vmatprep.subr.mxu0 0.0
    %257 = vmatpush1.msra.mxu0 0.0
    %258 = vmatprep.subr.mxu0 0.0
    %259 = vmatpush1.msra.mxu0 0.0
    %260 = vmatprep.subr.mxu0 0.0
    %261 = vmatpush1.msra.mxu0 0.0
    %262 = vmatprep.subr.mxu0 0.0
    %263 = vmatpush1.msra.mxu0 0.0
    %264 = vmatprep.subr.mxu0 0.0
    %265 = vmatpush1.msra.mxu0 0.0
    %266 = vmatprep.subr.mxu0 0.0
    %267 = vmatpush1.msra.mxu0 0.0
    %268 = vmatprep.subr.mxu0 0.0
    %269 = vmatpush1.msra.mxu0 0.0
    %270 = vmatprep.subr.mxu0 0.0
    %271 = vmatpush1.msra.mxu0 0.0
    %272 = vmatprep.subr.mxu0 0.0
    %273 = vmatpush1.msra.mxu0 0.0
    %274 = vmatprep.subr.mxu0 0.0
    %275 = vmatpush1.msra.mxu0 0.0
    %276 = vmatprep.subr.mxu0 0.0
    %277 = vmatpush1.msra.mxu0 0.0
    %278 = vmatprep.subr.mxu0 0.0
    %279 = vmatpush1.msra.mxu0 0.0
    %280 = vmatprep.subr.mxu0 0.0
    %281 = vmatpush1.msra.mxu0 0.0
    %282 = vmatprep.subr.mxu0 0.0
    %283 = vmatpush1.msra.mxu0 0.0
    %284 = vmatprep.subr.mxu0 0.0
    %285 = vmatpush1.msra.mxu0 0.0
    %286 = vmatprep.subr.mxu0 0.0
    %287 = vmatpush1.msra.mxu0 0.0
    %288 = vmatprep.subr.mxu0 0.0
    %289 = vmatpush1.msra.mxu0 0.0
    %290 = vmatprep.subr.mxu0 0.0
    %291 = vmatpush1.msra.mxu0 0.0
    %292 = vmatprep.subr.mxu0 0.0
    %293 = vmatpush1.msra.mxu0 0.0
    %294 = vmatprep.mubr.f32.mxu0 0.0
    %295 = vmatmul.mubr.f32.gmra.mrb[0].mxu0 %v228
    %v296 = vpop.f32.mrb[0].mxu0
    %v297 = vadd.f32 %v225, %v296
    %v298 = vpop.f32.mrb[0].mxu0
    %299 = vdwg.mxu0
    %v300 = vsel %vm181, %v297, 0.0
    %301 = vadd.xlane.f32.xlu0 %v300
    %v302 = vpop.xlane.xlu0 %301
    %v303 = vmul.f32 %v302, 0.015625
    %v304 = vmul.f32 %v297, %v297
    %v305 = vsel %vm181, %v304, 0.0
    %306 = vadd.xlane.f32.xlu0 %v305
    %v307 = vpop.xlane.xlu0 %306
    %v308 = vmul.f32 %v307, 0.015625
    %v309 = vmul.f32 %v303, %v303
    %v310 = vsub.f32 %v308, %v309
    %v311 = vmax.f32 %v310, 0.0
    %v312 = vsub.f32 %v297, %v303
    %v313 = vadd.f32 %v311, 1e-05
    %v314 = vrsqrt.pop %v313
    %v315 = vmul.f32 %v312, %v314
    %v317 = vlaneseq
    %v318 = vshrl.u32 %v317, 7
    %v319 = vsub.s32 0, %v318
    %v320 = vrot.slane %v95, %v319
    %v322 = vmul.f32 %v315, %v320
    %v324 = vlaneseq
    %v325 = vshrl.u32 %v324, 7
    %v326 = vsub.s32 0, %v325
    %v327 = vrot.slane %v96, %v326
    %v329 = vadd.f32 %v322, %v327
    %v330 = vmax.f32 %v329, 0.0
    %v331 = vld [vmem:[#allocation7] sm:$0xff]
    %v332 = vld [vmem:[#allocation7 + $0x8] sm:$0xff]
    %v333 = vld [vmem:[#allocation7 + $0x10] sm:$0xff]
    %v334 = vld [vmem:[#allocation7 + $0x18] sm:$0xff]
    %v335 = vld [vmem:[#allocation7 + $0x20] sm:$0xff]
    %v336 = vld [vmem:[#allocation7 + $0x28] sm:$0xff]
    %v337 = vld [vmem:[#allocation7 + $0x30] sm:$0xff]
    %v338 = vld [vmem:[#allocation7 + $0x38] sm:$0xff]
    %v340 = vsel %vm181, %v330, 0
    %342 = vmatprep.subr.mxu0 0.0
    %343 = vmatpush1.msra.mxu0 %v331
    %344 = vmatprep.subr.mxu0 0.0
    %345 = vmatpush1.msra.mxu0 %v332
    %346 = vmatprep.subr.mxu0 0.0
    %347 = vmatpush1.msra.mxu0 %v333
    %348 = vmatprep.subr.mxu0 0.0
    %349 = vmatpush1.msra.mxu0 %v334
    %350 = vmatprep.subr.mxu0 0.0
    %351 = vmatpush1.msra.mxu0 %v335
    %352 = vmatprep.subr.mxu0 0.0
    %353 = vmatpush1.msra.mxu0 %v336
    %354 = vmatprep.subr.mxu0 0.0
    %355 = vmatpush1.msra.mxu0 %v337
    %356 = vmatprep.subr.mxu0 0.0
    %357 = vmatpush1.msra.mxu0 %v338
    %358 = vmatprep.subr.mxu0 0.0
    %359 = vmatpush1.msra.mxu0 0.0
    %360 = vmatprep.subr.mxu0 0.0
    %361 = vmatpush1.msra.mxu0 0.0
    %362 = vmatprep.subr.mxu0 0.0
    %363 = vmatpush1.msra.mxu0 0.0
    %364 = vmatprep.subr.mxu0 0.0
    %365 = vmatpush1.msra.mxu0 0.0
    %366 = vmatprep.subr.mxu0 0.0
    %367 = vmatpush1.msra.mxu0 0.0
    %368 = vmatprep.subr.mxu0 0.0
    %369 = vmatpush1.msra.mxu0 0.0
    %370 = vmatprep.subr.mxu0 0.0
    %371 = vmatpush1.msra.mxu0 0.0
    %372 = vmatprep.subr.mxu0 0.0
    %373 = vmatpush1.msra.mxu0 0.0
    %374 = vmatprep.subr.mxu0 0.0
    %375 = vmatpush1.msra.mxu0 0.0
    %376 = vmatprep.subr.mxu0 0.0
    %377 = vmatpush1.msra.mxu0 0.0
    %378 = vmatprep.subr.mxu0 0.0
    %379 = vmatpush1.msra.mxu0 0.0
    %380 = vmatprep.subr.mxu0 0.0
    %381 = vmatpush1.msra.mxu0 0.0
    %382 = vmatprep.subr.mxu0 0.0
    %383 = vmatpush1.msra.mxu0 0.0
    %384 = vmatprep.subr.mxu0 0.0
    %385 = vmatpush1.msra.mxu0 0.0
    %386 = vmatprep.subr.mxu0 0.0
    %387 = vmatpush1.msra.mxu0 0.0
    %388 = vmatprep.subr.mxu0 0.0
    %389 = vmatpush1.msra.mxu0 0.0
    %390 = vmatprep.subr.mxu0 0.0
    %391 = vmatpush1.msra.mxu0 0.0
    %392 = vmatprep.subr.mxu0 0.0
    %393 = vmatpush1.msra.mxu0 0.0
    %394 = vmatprep.subr.mxu0 0.0
    %395 = vmatpush1.msra.mxu0 0.0
    %396 = vmatprep.subr.mxu0 0.0
    %397 = vmatpush1.msra.mxu0 0.0
    %398 = vmatprep.subr.mxu0 0.0
    %399 = vmatpush1.msra.mxu0 0.0
    %400 = vmatprep.subr.mxu0 0.0
    %401 = vmatpush1.msra.mxu0 0.0
    %402 = vmatprep.subr.mxu0 0.0
    %403 = vmatpush1.msra.mxu0 0.0
    %404 = vmatprep.subr.mxu0 0.0
    %405 = vmatpush1.msra.mxu0 0.0
    %406 = vmatprep.mubr.f32.mxu0 0.0
    %407 = vmatmul.mubr.f32.gmra.mrb[0].mxu0 %v340
    %v408 = vpop.f32.mrb[0].mxu0
    %v409 = vadd.f32 0.0, %v408
    %v410 = vpop.f32.mrb[0].mxu0
    %411 = vdwg.mxu0
    %v413 = vlaneseq
    %v414 = vshrl.u32 %v413, 7
    %v415 = vsub.s32 0, %v414
    %v416 = vrot.slane %v97, %v415
    %v418 = vadd.f32 %v409, %v416
    %v419 = vxor.u32 %v418, 2147483648
    %v420 = vmul.f32 %v419, 1.442695
    %v421 = vpow.pop %v420
    %v422 = vadd.f32 %v421, 1.0
    %v423 = vrcp.pop %v422
    %v424 = vmul.f32 1.0, %v423
    %v425 = vmul.f32 %v424, 10.0
    %vm426 = vcmask 31744
    %427 = vst.msk [vmem:[%s11] sm:$0xff] %vm426, %v425
    // Predicated region
    $region62: #{tpu_custom_call.1} parent=1 // pred_check
      _
    $region63: #{tpu_custom_call.1} parent=1 // pred_check_branch
      %429 = sbr.rel (0) target = $region65
    $region64: #{tpu_custom_call.1} parent=1 // pred_region
      _
    $region65: #{tpu_custom_call.1} parent=1 // pred_fallthru
      _
    // Predicated region
    $region66: #{tpu_custom_call.1} parent=1 // pred_check
      _
    $region67: #{tpu_custom_call.1} parent=1 // pred_check_branch
      %431 = sbr.rel (0) target = $region69
    $region68: #{tpu_custom_call.1} parent=1 // pred_region
      _
    $region69: #{tpu_custom_call.1} parent=1 // pred_fallthru
      _
    %432 = vsyncpa [#allocation3], 1
    %433 = vsyncpa [#allocation5], 1
    %434 = vsyncpa [#allocation8], 1

</llo_original>
